<compile_context>
chip_gen: v7x
topology: tpu7x:2x2x1
jax: 0.10.0
libtpu: 0.0.40
codegen_flags: <defaults>
</compile_context>

<pallas_src>
import functools
import math

import jax
import jax.numpy as jnp
from jax.experimental import pallas as pl
from jax.experimental.pallas import tpu as pltpu

IN_FEATURES = 10
OUT_FEATURES = 10
N_PAD = 128  # lane-dense output width


def _linear_kernel(x_ref, w_ref, o_ref):
    # (TB, K) @ (K, 128) -> (TB, 128) on the MXU, f32 accumulation.
    x = x_ref[...].astype(w_ref.dtype)
    o_ref[...] = jnp.dot(x, w_ref[...], preferred_element_type=jnp.float32)


def prepare_weight(weight, compute_dtype=jnp.float32):
    """One-time parameter prep (hoisted out of the forward hot path).

    PyTorch-layout weight (out_features, in_features) -> transposed and
    lane-padded (in_features, N_PAD) in the desired compute dtype, so the
    kernel computes y = x @ W^T with zero columns beyond OUT_FEATURES.
    """
    n, k = weight.shape
    assert n == OUT_FEATURES and k == IN_FEATURES
    wt = jnp.zeros((k, N_PAD), compute_dtype)
    return wt.at[:, :n].set(weight.T.astype(compute_dtype))


def _round_up(v, m):
    return ((v + m - 1) // m) * m


@functools.partial(jax.jit, static_argnames=("block_b",))
def discriminator_forward_padded(x, weight_prepped, *, block_b=1024):
    """Returns (B, N_PAD) f32; columns >= OUT_FEATURES are zero."""
    B, K = x.shape
    Kw, Np = weight_prepped.shape
    assert K == Kw == IN_FEATURES and Np == N_PAD

    # Largest sublane-aligned batch tile up to block_b; partial last block is
    # handled by Pallas (masked writeback), and each output row depends only on
    # its own x row, so boundary garbage never reaches valid rows.
    tb = min(block_b, max(8, _round_up(B, 8)))
    grid = (pl.cdiv(B, tb),)

    return pl.pallas_call(
        _linear_kernel,
        out_shape=jax.ShapeDtypeStruct((B, N_PAD), jnp.float32),
        grid_spec=pl.GridSpec(
            grid=grid,
            in_specs=[
                # x unpadded: last block dim == full array dim (10) -> no host pad.
                pl.BlockSpec((tb, K), lambda i: (i, 0)),
                # weight resident across the whole grid (same block index).
                pl.BlockSpec((K, N_PAD), lambda i: (0, 0)),
            ],
            out_specs=pl.BlockSpec((tb, N_PAD), lambda i: (i, 0)),
        ),
        compiler_params=pltpu.CompilerParams(
            # Batch axis is independent -> parallel (2x on v7x's two TCs).
            dimension_semantics=("parallel",),
        ),
    )(x, weight_prepped)


def discriminator_forward(x, weight_prepped, *, block_b=1024):
    # Lazy logical view; the slice lives outside the kernel hot path.
    return discriminator_forward_padded(x, weight_prepped, block_b=block_b)[
        :, :OUT_FEATURES
    ]


if __name__ == "__main__":
    key = jax.random.PRNGKey(0)
    k_w, k_x, k_x2 = jax.random.split(key, 3)

    # nn.Linear default init: U(-1/sqrt(fan_in), 1/sqrt(fan_in))
    bound = 1.0 / math.sqrt(IN_FEATURES)
    weight = jax.random.uniform(
        k_w, (OUT_FEATURES, IN_FEATURES), jnp.float32, minval=-bound, maxval=bound
    )
    w_prep = prepare_weight(weight)  # one-time, hoisted out of the forward path

    # Small-shape check (batch=2, features=10), matching the module spec.
    x = jax.random.normal(k_x, (2, IN_FEATURES), jnp.float32)
    y = discriminator_forward(x, w_prep)
    jax.block_until_ready(y)
    y_ref = x @ weight.T
    assert y.shape == (2, OUT_FEATURES)
    assert jnp.allclose(y, y_ref, atol=1e-5, rtol=1e-5)

    # Exercise the multi-block / partial-last-block batch-tiling path.
    x2 = jax.random.normal(k_x2, (300, IN_FEATURES), jnp.float32)
    y2 = discriminator_forward(x2, w_prep, block_b=128)  # grid=3, last block partial
    jax.block_until_ready(y2)
    assert jnp.allclose(y2, x2 @ weight.T, atol=1e-5, rtol=1e-5)

    print("KERNEL_OK")
</pallas_src>

<mosaic_0001>
module attributes {stable_mosaic.version = 11 : i64} {
  func.func @_linear_kernel(%arg0: i32, %arg1: memref<8x10xf32, #tpu.memory_space<vmem>>, %arg2: memref<10x128xf32, #tpu.memory_space<vmem>>, %arg3: memref<8x128xf32, #tpu.memory_space<vmem>>) attributes {dimension_semantics = [#tpu.dimension_semantics<parallel>], iteration_bounds = array<i64: 1>, scalar_prefetch = 0 : i64, scratch_operands = 0 : i64, tpu.core_type = #tpu.core_type<tc>, window_params = [{transform_indices = @transform_0, window_bounds = array<i64: 8, 10>}, {pipeline_mode = #tpu.pipeline_mode<synchronous>, transform_indices = @transform_1, window_bounds = array<i64: 10, 128>}, {transform_indices = @transform_2, window_bounds = array<i64: 8, 128>}]} {
    %c0 = arith.constant 0 : index
    %c0_0 = arith.constant 0 : index
    %0 = vector.load %arg1[%c0, %c0_0] : memref<8x10xf32, #tpu.memory_space<vmem>>, vector<8x10xf32>
    %c0_1 = arith.constant 0 : index
    %c0_2 = arith.constant 0 : index
    %1 = vector.load %arg2[%c0_1, %c0_2] : memref<10x128xf32, #tpu.memory_space<vmem>>, vector<10x128xf32>
    %cst = arith.constant dense<0.000000e+00> : vector<8x128xf32>
    %2 = tpu.matmul %0, %1, %cst {dimension_numbers = #tpu.dot_dimension_numbers<[1], [0], [0], [1], [0, 0, 1, 1], [], []>} : vector<8x10xf32>, vector<10x128xf32>, vector<8x128xf32> -> vector<8x128xf32>
    %c0_3 = arith.constant 0 : index
    %c0_4 = arith.constant 0 : index
    %3 = vector.load %arg3[%c0_3, %c0_4] : memref<8x128xf32, #tpu.memory_space<vmem>>, vector<8x128xf32>
    tpu.vector_store %arg3[%c0_3, %c0_4], %2 {strides = array<i32>} : memref<8x128xf32, #tpu.memory_space<vmem>>, vector<8x128xf32>,
    return
  }
  func.func @transform_0(%arg0: i32) -> (i32, i32) {
    %c0_i32 = arith.constant 0 : i32
    %c0_i32_0 = arith.constant 0 : i32
    return %arg0, %c0_i32 : i32, i32
  }
  func.func @transform_1(%arg0: i32) -> (i32, i32) {
    %c0_i32 = arith.constant 0 : i32
    %c0_i32_0 = arith.constant 0 : i32
    %c0_i32_1 = arith.constant 0 : i32
    return %c0_i32, %c0_i32_0 : i32, i32
  }
  func.func @transform_2(%arg0: i32) -> (i32, i32) {
    %c0_i32 = arith.constant 0 : i32
    %c0_i32_0 = arith.constant 0 : i32
    return %arg0, %c0_i32 : i32, i32
  }
}

</mosaic_0001>

<llo_original>
// kernel: discriminator_forward_padded.1
$region0: #{discriminator_forward_padded.1}
  #allocation0 [shape = 'u32[]', space=smem, size = 0x4, offset = 0x4, fixed_abs, tag = 'smem constant byte address 0x4 - core index']
  #allocation1 [shape = 'u32[144,128]{1,0:T(1,128)}', space=vmem, size = 0x12000, scoped, tag = 'internal scratch']
  %s0 = inlined_call_operand.hbm [shape: f32[2,10], index: 0, kind: input, shape index: {}]
  %s1 = inlined_call_operand.hbm [shape: f32[10,128], index: 1, kind: input, shape index: {}]
  %s2 = inlined_call_operand.hbm [shape: f32[2,128], index: 2, kind: output, shape index: {}]
  %s3 = sld [smem:[#allocation0]]
  $region26: #{discriminator_forward_padded.1} parent=0
    _
  %s5 = ssub.s32 1, %s3
  %s6 = scalar_select 0, %s5, %s3
  $region1: #{discriminator_forward_padded.1} parent=0
    #allocation2 [shape = 'u8[4096]{0}', space=vmem, size = 0x1000, scoped, tag = 'input window, operand 0, single buffered']
    #allocation3 [shape = 's32[1]{0}', space=sflag, size = 0x4, scoped, tag = 'scoped memory for discriminator_forward_padded.1']
    #allocation4 [shape = 's32[1]{0}', space=sflag, size = 0x4, scoped, tag = 'scoped memory for discriminator_forward_padded.1']
    #allocation5 [shape = 'u8[8192]{0}', space=vmem, size = 0x2000, scoped, tag = 'input window, operand 1, single buffered']
    #allocation6 [shape = 's32[1]{0}', space=sflag, size = 0x4, scoped, tag = 'scoped memory for discriminator_forward_padded.1']
    #allocation7 [shape = 'u8[4096]{0}', space=vmem, size = 0x1000, scoped, tag = 'output window, operand 0, single buffered']
    %7 = vsyncpa [#allocation3], 0
    %8 = vsyncpa [#allocation6], 0
    %9 = vsyncpa [#allocation4], 0
    // Predicated region
    $region2: #{discriminator_forward_padded.1} parent=1 // pred_check
      _
    $region3: #{discriminator_forward_padded.1} parent=1 // pred_check_branch
      %11 = sbr.rel (0) target = $region5
    $region4: #{discriminator_forward_padded.1} parent=1 // pred_region
      %s13 = ssub.s32 128, 32
      %14 = vsyncadd [#allocation3], %s13
      %s15 = sshll.u32 [#allocation2], 4
      %s16 = int_to_ptr.vmem [resolvable:$true] %s15
      %21 = dma.hbm_to_vmem [thread:$0]  %s0, 32, %s16, [#allocation3], 32, 32, 2
    $region5: #{discriminator_forward_padded.1} parent=1 // pred_fallthru
      _
    // Predicated region
    $region6: #{discriminator_forward_padded.1} parent=1 // pred_check
      _
    $region7: #{discriminator_forward_padded.1} parent=1 // pred_check_branch
      %23 = sbr.rel (0) target = $region9
    $region8: #{discriminator_forward_padded.1} parent=1 // pred_region
      %s25 = ssub.s32 256, 256
      %26 = vsyncadd [#allocation6], %s25
      %s27 = sshll.u32 [#allocation5], 4
      %s28 = int_to_ptr.vmem [resolvable:$true] %s27
      %33 = dma.hbm_to_vmem [thread:$0]  %s1, 256, %s28, [#allocation6], 128, 128, 8
    $region9: #{discriminator_forward_padded.1} parent=1 // pred_fallthru
      _
    // Predicated region
    $region10: #{discriminator_forward_padded.1} parent=1 // pred_check
      _
    $region11: #{discriminator_forward_padded.1} parent=1 // pred_check_branch
      %35 = sbr.rel (0) target = $region13
    $region12: #{discriminator_forward_padded.1} parent=1 // pred_region
      %36 = dma.done [#allocation3], 128
    $region13: #{discriminator_forward_padded.1} parent=1 // pred_fallthru
      _
    // Predicated region
    $region14: #{discriminator_forward_padded.1} parent=1 // pred_check
      _
    $region15: #{discriminator_forward_padded.1} parent=1 // pred_check_branch
      %38 = sbr.rel (0) target = $region17
    $region16: #{discriminator_forward_padded.1} parent=1 // pred_region
      %39 = dma.done [#allocation6], 256
    $region17: #{discriminator_forward_padded.1} parent=1 // pred_fallthru
      _
    %v40 = vld [vmem:[#allocation2] sm:$0xff]
    %v41 = vld [vmem:[#allocation5] sm:$0xff]
    %v42 = vld [vmem:[#allocation5 + $0x8] sm:$0x3]
    %vm43 = vcmask 80896
    %v45 = vsel %vm43, %v40, 0
    %vm47 = vcmask 1041408
    %v49 = vsel %vm47, %v42, 0
    %51 = vmatprep.subr.mxu0 0.0
    %52 = vmatpush1.msra.mxu0 %v41
    %53 = vmatprep.subr.mxu0 0.0
    %54 = vmatpush1.msra.mxu0 %v49
    %55 = vmatprep.subr.mxu0 0.0
    %56 = vmatpush1.msra.mxu0 0.0
    %57 = vmatprep.subr.mxu0 0.0
    %58 = vmatpush1.msra.mxu0 0.0
    %59 = vmatprep.subr.mxu0 0.0
    %60 = vmatpush1.msra.mxu0 0.0
    %61 = vmatprep.subr.mxu0 0.0
    %62 = vmatpush1.msra.mxu0 0.0
    %63 = vmatprep.subr.mxu0 0.0
    %64 = vmatpush1.msra.mxu0 0.0
    %65 = vmatprep.subr.mxu0 0.0
    %66 = vmatpush1.msra.mxu0 0.0
    %67 = vmatprep.subr.mxu0 0.0
    %68 = vmatpush1.msra.mxu0 0.0
    %69 = vmatprep.subr.mxu0 0.0
    %70 = vmatpush1.msra.mxu0 0.0
    %71 = vmatprep.subr.mxu0 0.0
    %72 = vmatpush1.msra.mxu0 0.0
    %73 = vmatprep.subr.mxu0 0.0
    %74 = vmatpush1.msra.mxu0 0.0
    %75 = vmatprep.subr.mxu0 0.0
    %76 = vmatpush1.msra.mxu0 0.0
    %77 = vmatprep.subr.mxu0 0.0
    %78 = vmatpush1.msra.mxu0 0.0
    %79 = vmatprep.subr.mxu0 0.0
    %80 = vmatpush1.msra.mxu0 0.0
    %81 = vmatprep.subr.mxu0 0.0
    %82 = vmatpush1.msra.mxu0 0.0
    %83 = vmatprep.subr.mxu0 0.0
    %84 = vmatpush1.msra.mxu0 0.0
    %85 = vmatprep.subr.mxu0 0.0
    %86 = vmatpush1.msra.mxu0 0.0
    %87 = vmatprep.subr.mxu0 0.0
    %88 = vmatpush1.msra.mxu0 0.0
    %89 = vmatprep.subr.mxu0 0.0
    %90 = vmatpush1.msra.mxu0 0.0
    %91 = vmatprep.subr.mxu0 0.0
    %92 = vmatpush1.msra.mxu0 0.0
    %93 = vmatprep.subr.mxu0 0.0
    %94 = vmatpush1.msra.mxu0 0.0
    %95 = vmatprep.subr.mxu0 0.0
    %96 = vmatpush1.msra.mxu0 0.0
    %97 = vmatprep.subr.mxu0 0.0
    %98 = vmatpush1.msra.mxu0 0.0
    %99 = vmatprep.subr.mxu0 0.0
    %100 = vmatpush1.msra.mxu0 0.0
    %101 = vmatprep.subr.mxu0 0.0
    %102 = vmatpush1.msra.mxu0 0.0
    %103 = vmatprep.subr.mxu0 0.0
    %104 = vmatpush1.msra.mxu0 0.0
    %105 = vmatprep.subr.mxu0 0.0
    %106 = vmatpush1.msra.mxu0 0.0
    %107 = vmatprep.subr.mxu0 0.0
    %108 = vmatpush1.msra.mxu0 0.0
    %109 = vmatprep.subr.mxu0 0.0
    %110 = vmatpush1.msra.mxu0 0.0
    %111 = vmatprep.subr.mxu0 0.0
    %112 = vmatpush1.msra.mxu0 0.0
    %113 = vmatprep.subr.mxu0 0.0
    %114 = vmatpush1.msra.mxu0 0.0
    %115 = vmatprep.mubr.f32.mxu0 0.0
    %116 = vmatmul.mubr.f32.gmra.mrb[0].mxu0 %v45
    %v117 = vpop.f32.mrb[0].mxu0
    %v118 = vadd.f32 0.0, %v117
    %v119 = vpop.f32.mrb[0].mxu0
    %120 = vdwg.mxu0
    %121 = vst [vmem:[#allocation7] sm:$0xff] %v118
    // Predicated region
    $region18: #{discriminator_forward_padded.1} parent=1 // pred_check
      _
    $region19: #{discriminator_forward_padded.1} parent=1 // pred_check_branch
      %123 = sbr.rel (0) target = $region21
    $region20: #{discriminator_forward_padded.1} parent=1 // pred_region
      %s125 = ssub.s32 128, 32
      %126 = vsyncadd [#allocation4], %s125
      %s127 = sshll.u32 [#allocation7], 4
      %s128 = int_to_ptr.vmem [resolvable:$true] %s127
      %133 = dma.vmem_to_hbm [thread:$0]  %s128, 32, %s2, [#allocation4], 32, 32, 2
    $region21: #{discriminator_forward_padded.1} parent=1 // pred_fallthru
      _
    // Predicated region
    $region22: #{discriminator_forward_padded.1} parent=1 // pred_check
      _
    $region23: #{discriminator_forward_padded.1} parent=1 // pred_check_branch
      %135 = sbr.rel (0) target = $region25
    $region24: #{discriminator_forward_padded.1} parent=1 // pred_region
      %136 = dma.done [#allocation4], 128
    $region25: #{discriminator_forward_padded.1} parent=1 // pred_fallthru
      _
    %137 = vsyncpa [#allocation3], 1
    %138 = vsyncpa [#allocation6], 1
    %139 = vsyncpa [#allocation4], 1

</llo_original>
